<compile_context>
chip_gen: v6e
topology: v6e:2x2x1
jax: 0.10.0
libtpu: 0.0.40
codegen_flags: <defaults>
</compile_context>

<pallas_src>
import jax
import jax.numpy as jnp
import numpy as np
from jax import lax
from jax.experimental import pallas as pl
from jax.experimental.pallas import tpu as pltpu

BN_EPS = 1e-5


def _layer_geometry(params, L_in):
    """Static per-layer shapes derived from the (python) config."""
    dims = []
    L = L_in
    for p in params:
        Cout, Cin, K = p["w"].shape
        s, pad = int(p["stride"]), int(p["padding"])
        Lp = L + 2 * pad
        Lout = (Lp - K) // s + 1
        assert Lout >= 1, "layer produces empty output"
        # static guard: every tap of every output column stays inside this sample's
        # padded window (no silent neighbour reads for future configs)
        assert (Lout - 1) * s + (K - 1) <= Lp - 1
        dims.append(dict(Cin=Cin, Cout=Cout, K=K, stride=s, pad=pad,
                         Lin=L, Lp=Lp, Lout=Lout,
                         Lph=Lout + (K - 1) // s))
        L = Lout
    for a, b in zip(dims[:-1], dims[1:]):
        assert a["Cout"] == b["Cin"], "channel mismatch between consecutive layers"
    return dims


def _phase_select_matrix(d):
    """(Lp, s*Lph) 0/1 matrix rearranging padded columns into s stride-phases so every
    conv tap becomes a CONTIGUOUS lane slice (no lane-strided reads on TPU)."""
    Lp, s, Lph = d["Lp"], d["stride"], d["Lph"]
    P = np.zeros((Lp, s * Lph), np.float32)
    for r in range(s):
        for m in range(Lph):
            i = m * s + r
            if i < Lp:
                P[i, r * Lph + m] = 1.0
    return jnp.asarray(P, jnp.bfloat16)


def _make_encoder_kernel(dims, N):
    """Fused (conv -> BN -> ReLU) x n_layers kernel for a static config."""
    n_layers = len(dims)

    def kernel(*refs):
        # refs = [x, (wcat, gamma_beta[, P]) per layer, out, pad_scratch, xcat_scratch]
        idx = 0
        x_ref = refs[idx]; idx += 1
        layers = []
        for d in dims:
            w_ref = refs[idx]; idx += 1
            gb_ref = refs[idx]; idx += 1
            p_ref = None
            if d["stride"] > 1:
                p_ref = refs[idx]; idx += 1
            layers.append((w_ref, gb_ref, p_ref))
        o_ref = refs[idx]; idx += 1
        pad_sc = refs[idx]; idx += 1      # (max N*Cin, max Lp)        bf16
        xcat_sc = refs[idx]; idx += 1     # (max K*Cin, max N*Lout)    bf16

        # Layer-0 input -> padded scratch: one slab copy (samples on sublanes, L on lanes).
        d0 = dims[0]
        pad_sc[0:N * d0["Cin"], d0["pad"]:d0["pad"] + d0["Lin"]] = x_ref[...]

        for li, d in enumerate(dims):
            w_ref, gb_ref, p_ref = layers[li]
            Cin, Cout, K = d["Cin"], d["Cout"], d["K"]
            s, pad = d["stride"], d["pad"]
            Lin, Lp, Lout, Lph = d["Lin"], d["Lp"], d["Lout"], d["Lph"]
            rows = N * Cin

            # Zero ONLY the padding columns (interior already holds this layer's input).
            if pad > 0:
                pad_sc[0:rows, 0:pad] = jnp.zeros((rows, pad), pad_sc.dtype)
                pad_sc[0:rows, pad + Lin:Lp] = jnp.zeros((rows, pad), pad_sc.dtype)

            # Stride > 1: one small matmul against the 0/1 phase-selection matrix turns
            # every tap into a contiguous lane slice (exact: selects bf16 values).
            if s > 1:
                x_src = jnp.dot(pad_sc[0:rows, 0:Lp], p_ref[...],
                                preferred_element_type=jnp.float32).astype(jnp.bfloat16)
            else:
                x_src = pad_sc[0:rows, 0:Lp]

            # Build the stacked-tap / stacked-sample RHS (K*Cin, N*Lout) in bf16.
            for n in range(N):
                for k in range(K):
                    off = (k % s) * Lph + (k // s) if s > 1 else k
                    xcat_sc[k * Cin:(k + 1) * Cin, n * Lout:(n + 1) * Lout] = \
                        x_src[n * Cin:(n + 1) * Cin, off:off + Lout]

            # ONE MXU matmul per layer (taps on contraction, samples on lanes), f32 acc.
            # NOTE: conv bias intentionally omitted -- cancelled by BN mean subtraction.
            y = jnp.dot(w_ref[...], xcat_sc[0:K * Cin, 0:N * Lout],
                        preferred_element_type=jnp.float32)          # (Cout, N*Lout)

            # Training-mode BatchNorm1d, single pass (E[x^2] - mean^2), all f32.
            M = float(N * Lout)
            mean = jnp.sum(y, axis=1, keepdims=True) / M              # (Cout, 1)
            ex2 = jnp.sum(y * y, axis=1, keepdims=True) / M
            var = ex2 - mean * mean
            inv_std = lax.rsqrt(var + BN_EPS)
            scale = gb_ref[:, 0:1] * inv_std                          # gamma * inv_std
            shift = gb_ref[:, 1:2] - mean * scale                     # beta - mean*scale
            y = jnp.maximum(y * scale + shift, 0.0)                   # ReLU, (Cout, N*Lout)

            if li + 1 < n_layers:
                # Write straight into the next layer's padded scratch rows (cast once).
                dn = dims[li + 1]
                yb = y.astype(jnp.bfloat16)
                for n in range(N):
                    pad_sc[n * Cout:(n + 1) * Cout, dn["pad"]:dn["pad"] + Lout] = \
                        yb[:, n * Lout:(n + 1) * Lout]
            else:
                # Final output: (N*Cout, Lout) channel-major -- a free reshape of NCL.
                for n in range(N):
                    o_ref[n * Cout:(n + 1) * Cout, :] = y[:, n * Lout:(n + 1) * Lout]

    return kernel


def my_encoder_forward(params, x):
    """x: (N, C, L) float32 (PyTorch NCL). Returns (N, C_out, L_out)."""
    N, C0, L0 = x.shape
    dims = _layer_geometry(params, L0)

    # Entry is a FREE reshape: NCL is already channel-major -> (N*C, L), bf16 operand.
    x2d = x.reshape(N * C0, L0).astype(jnp.bfloat16)

    inputs = [x2d]
    for p, d in zip(params, dims):
        w = jnp.asarray(p["w"], jnp.float32)                             # (Cout, Cin, K)
        wcat = jnp.transpose(w, (0, 2, 1)).reshape(d["Cout"], d["K"] * d["Cin"])
        inputs.append(wcat.astype(jnp.bfloat16))                         # (Cout, K*Cin)
        gb = jnp.stack([p["gamma"], p["beta"]], axis=1).astype(jnp.float32)  # (Cout, 2)
        inputs.append(gb)
        if d["stride"] > 1:
            inputs.append(_phase_select_matrix(d))                       # (Lp, s*Lph)
        # p["b"] (conv bias) intentionally not passed: no-op under training-mode BN.

    Ll, Cl = dims[-1]["Lout"], dims[-1]["Cout"]
    pad_rows = max(N * d["Cin"] for d in dims)
    pad_cols = max(d["Lp"] for d in dims)
    xc_rows = max(d["K"] * d["Cin"] for d in dims)
    xc_cols = max(N * d["Lout"] for d in dims)

    def _full(shape):
        return pl.BlockSpec(shape, lambda i: (0,) * len(shape))

    out2d = pl.pallas_call(
        _make_encoder_kernel(dims, N),
        grid=(1,),
        in_specs=[_full(a.shape) for a in inputs],
        out_specs=_full((N * Cl, Ll)),
        out_shape=jax.ShapeDtypeStruct((N * Cl, Ll), jnp.float32),
        # Shared scratch reused by every layer: peak = max layer, not the sum.
        scratch_shapes=[pltpu.VMEM((pad_rows, pad_cols), jnp.bfloat16),
                        pltpu.VMEM((xc_rows, xc_cols), jnp.bfloat16)],
        compiler_params=pltpu.CompilerParams(
            dimension_semantics=("arbitrary",),
            vmem_limit_bytes=32 * 1024 * 1024),
    )(*inputs)

    # Exit is a FREE reshape back to PyTorch NCL.
    return out2d.reshape(N, Cl, Ll)


def init_encoder_params(key, config_encoder):
    """Deterministic synthetic parameters matching nn.Conv1d / nn.BatchNorm1d shapes."""
    params = []
    for conf in config_encoder:
        key, k1, k2, k3, k4 = jax.random.split(key, 5)
        Cin, Cout, K = conf["in_channels"], conf["out_channels"], conf["kernel_size"]
        params.append(dict(
            w=0.1 * jax.random.normal(k1, (Cout, Cin, K), jnp.float32),
            b=0.1 * jax.random.normal(k2, (Cout,), jnp.float32),   # unused: BN cancels it
            gamma=1.0 + 0.1 * jax.random.normal(k3, (Cout,), jnp.float32),
            beta=0.1 * jax.random.normal(k4, (Cout,), jnp.float32),
            stride=conf.get("stride", 1),
            padding=conf.get("padding", 0),
        ))
    return params


def reference_forward(params, x):
    """Pure-JAX reference (Conv1d+bias, training-mode BN, ReLU). Operands rounded to bf16
    like the kernel's MXU path so the comparison tolerance can stay tight."""
    for p in params:
        xb = x.astype(jnp.bfloat16).astype(jnp.float32)
        wb = p["w"].astype(jnp.bfloat16).astype(jnp.float32)
        y = lax.conv_general_dilated(
            xb, wb, window_strides=(p["stride"],),
            padding=[(p["padding"], p["padding"])],
            dimension_numbers=("NCH", "OIH", "NCH"))
        y = y + p["b"][None, :, None]              # bias kept here; BN cancels it below
        mean = y.mean(axis=(0, 2), keepdims=True)
        var = ((y - mean) ** 2).mean(axis=(0, 2), keepdims=True)
        z = (y - mean) * lax.rsqrt(var + BN_EPS)
        z = z * p["gamma"][None, :, None] + p["beta"][None, :, None]
        x = jnp.maximum(z, 0.0)
    return x


if __name__ == "__main__":
    config_encoder = [
        dict(in_channels=4, out_channels=8, kernel_size=3, stride=1, padding=1),
        dict(in_channels=8, out_channels=16, kernel_size=3, stride=2, padding=1),
    ]

    key = jax.random.PRNGKey(0)
    key, pkey, xkey = jax.random.split(key, 3)
    params = init_encoder_params(pkey, config_encoder)

    # NCL input, like PyTorch Conv1d: (batch=2, channels=4, length=16)
    x = jax.random.normal(xkey, (2, 4, 16), jnp.float32)

    out = my_encoder_forward(params, x)
    out = jax.block_until_ready(out)

    assert out.shape == (2, 16, 8), out.shape   # block1: L=16 -> block2 (stride 2): L=8
    assert bool(jnp.all(jnp.isfinite(out)))

    ref = reference_forward(params, x)
    max_err = float(jnp.max(jnp.abs(out - ref)))
    assert max_err < 5e-2, f"max abs err vs reference: {max_err}"

    print("KERNEL_OK")
</pallas_src>

<mosaic_0001>
module attributes {stable_mosaic.version = 11 : i64} {
  func.func @kernel(%arg0: i32, %arg1: memref<8x16xbf16, #tpu.memory_space<vmem>>, %arg2: memref<8x12xbf16, #tpu.memory_space<vmem>>, %arg3: memref<8x2xf32, #tpu.memory_space<vmem>>, %arg4: memref<16x24xbf16, #tpu.memory_space<vmem>>, %arg5: memref<16x2xf32, #tpu.memory_space<vmem>>, %arg6: memref<18x18xbf16, #tpu.memory_space<vmem>>, %arg7: memref<32x8xf32, #tpu.memory_space<vmem>>, %arg8: memref<16x18xbf16, #tpu.memory_space<vmem>>, %arg9: memref<24x32xbf16, #tpu.memory_space<vmem>>) attributes {dimension_semantics = [#tpu.dimension_semantics<arbitrary>], iteration_bounds = array<i64: 1>, scalar_prefetch = 0 : i64, scratch_operands = 2 : i64, tpu.core_type = #tpu.core_type<tc>, window_params = [{pipeline_mode = #tpu.pipeline_mode<synchronous>, transform_indices = @transform_0, window_bounds = array<i64: 8, 16>}, {pipeline_mode = #tpu.pipeline_mode<synchronous>, transform_indices = @transform_1, window_bounds = array<i64: 8, 12>}, {pipeline_mode = #tpu.pipeline_mode<synchronous>, transform_indices = @transform_2, window_bounds = array<i64: 8, 2>}, {pipeline_mode = #tpu.pipeline_mode<synchronous>, transform_indices = @transform_3, window_bounds = array<i64: 16, 24>}, {pipeline_mode = #tpu.pipeline_mode<synchronous>, transform_indices = @transform_4, window_bounds = array<i64: 16, 2>}, {pipeline_mode = #tpu.pipeline_mode<synchronous>, transform_indices = @transform_5, window_bounds = array<i64: 18, 18>}, {pipeline_mode = #tpu.pipeline_mode<synchronous>, transform_indices = @transform_6, window_bounds = array<i64: 32, 8>}]} {
    %c0 = arith.constant 0 : index
    %c0_0 = arith.constant 0 : index
    %0 = vector.load %arg1[%c0, %c0_0] : memref<8x16xbf16, #tpu.memory_space<vmem>>, vector<8x16xbf16>
    %c0_1 = arith.constant 0 : index
    %c1 = arith.constant 1 : index
    %1 = vector.load %arg8[%c0_1, %c1] : memref<16x18xbf16, #tpu.memory_space<vmem>>, vector<8x16xbf16>
    tpu.vector_store %arg8[%c0_1, %c1], %0 {strides = array<i32>} : memref<16x18xbf16, #tpu.memory_space<vmem>>, vector<8x16xbf16>,
    %cst = arith.constant 0.000000e+00 : bf16
    %2 = vector.broadcast %cst : bf16 to vector<8x1xbf16>
    %c0_2 = arith.constant 0 : index
    %c0_3 = arith.constant 0 : index
    %3 = vector.load %arg8[%c0_2, %c0_3] : memref<16x18xbf16, #tpu.memory_space<vmem>>, vector<8x1xbf16>
    tpu.vector_store %arg8[%c0_2, %c0_3], %2 {strides = array<i32>} : memref<16x18xbf16, #tpu.memory_space<vmem>>, vector<8x1xbf16>,
    %cst_4 = arith.constant 0.000000e+00 : bf16
    %4 = vector.broadcast %cst_4 : bf16 to vector<8x1xbf16>
    %c0_5 = arith.constant 0 : index
    %c17 = arith.constant 17 : index
    %5 = vector.load %arg8[%c0_5, %c17] : memref<16x18xbf16, #tpu.memory_space<vmem>>, vector<8x1xbf16>
    tpu.vector_store %arg8[%c0_5, %c17], %4 {strides = array<i32>} : memref<16x18xbf16, #tpu.memory_space<vmem>>, vector<8x1xbf16>,
    %c0_6 = arith.constant 0 : index
    %c0_7 = arith.constant 0 : index
    %6 = vector.load %arg8[%c0_6, %c0_7] : memref<16x18xbf16, #tpu.memory_space<vmem>>, vector<8x18xbf16>
    %7 = vector.extract_strided_slice %6 {offsets = [0, 0], sizes = [4, 16], strides = [1, 1]} : vector<8x18xbf16> to vector<4x16xbf16>
    %c0_8 = arith.constant 0 : index
    %c0_9 = arith.constant 0 : index
    %8 = vector.load %arg9[%c0_8, %c0_9] : memref<24x32xbf16, #tpu.memory_space<vmem>>, vector<4x16xbf16>
    tpu.vector_store %arg9[%c0_8, %c0_9], %7 {strides = array<i32>} : memref<24x32xbf16, #tpu.memory_space<vmem>>, vector<4x16xbf16>,
    %9 = vector.extract_strided_slice %6 {offsets = [0, 1], sizes = [4, 16], strides = [1, 1]} : vector<8x18xbf16> to vector<4x16xbf16>
    %c4 = arith.constant 4 : index
    %c0_10 = arith.constant 0 : index
    %10 = vector.load %arg9[%c4, %c0_10] : memref<24x32xbf16, #tpu.memory_space<vmem>>, vector<4x16xbf16>
    tpu.vector_store %arg9[%c4, %c0_10], %9 {strides = array<i32>} : memref<24x32xbf16, #tpu.memory_space<vmem>>, vector<4x16xbf16>,
    %11 = vector.extract_strided_slice %6 {offsets = [0, 2], sizes = [4, 16], strides = [1, 1]} : vector<8x18xbf16> to vector<4x16xbf16>
    %c8 = arith.constant 8 : index
    %c0_11 = arith.constant 0 : index
    %12 = vector.load %arg9[%c8, %c0_11] : memref<24x32xbf16, #tpu.memory_space<vmem>>, vector<4x16xbf16>
    tpu.vector_store %arg9[%c8, %c0_11], %11 {strides = array<i32>} : memref<24x32xbf16, #tpu.memory_space<vmem>>, vector<4x16xbf16>,
    %13 = vector.extract_strided_slice %6 {offsets = [4, 0], sizes = [4, 16], strides = [1, 1]} : vector<8x18xbf16> to vector<4x16xbf16>
    %c0_12 = arith.constant 0 : index
    %c16 = arith.constant 16 : index
    %14 = vector.load %arg9[%c0_12, %c16] : memref<24x32xbf16, #tpu.memory_space<vmem>>, vector<4x16xbf16>
    tpu.vector_store %arg9[%c0_12, %c16], %13 {strides = array<i32>} : memref<24x32xbf16, #tpu.memory_space<vmem>>, vector<4x16xbf16>,
    %15 = vector.extract_strided_slice %6 {offsets = [4, 1], sizes = [4, 16], strides = [1, 1]} : vector<8x18xbf16> to vector<4x16xbf16>
    %c4_13 = arith.constant 4 : index
    %c16_14 = arith.constant 16 : index
    %16 = vector.load %arg9[%c4_13, %c16_14] : memref<24x32xbf16, #tpu.memory_space<vmem>>, vector<4x16xbf16>
    tpu.vector_store %arg9[%c4_13, %c16_14], %15 {strides = array<i32>} : memref<24x32xbf16, #tpu.memory_space<vmem>>, vector<4x16xbf16>,
    %17 = vector.extract_strided_slice %6 {offsets = [4, 2], sizes = [4, 16], strides = [1, 1]} : vector<8x18xbf16> to vector<4x16xbf16>
    %c8_15 = arith.constant 8 : index
    %c16_16 = arith.constant 16 : index
    %18 = vector.load %arg9[%c8_15, %c16_16] : memref<24x32xbf16, #tpu.memory_space<vmem>>, vector<4x16xbf16>
    tpu.vector_store %arg9[%c8_15, %c16_16], %17 {strides = array<i32>} : memref<24x32xbf16, #tpu.memory_space<vmem>>, vector<4x16xbf16>,
    %c0_17 = arith.constant 0 : index
    %c0_18 = arith.constant 0 : index
    %19 = vector.load %arg2[%c0_17, %c0_18] : memref<8x12xbf16, #tpu.memory_space<vmem>>, vector<8x12xbf16>
    %c0_19 = arith.constant 0 : index
    %c0_20 = arith.constant 0 : index
    %20 = vector.load %arg9[%c0_19, %c0_20] : memref<24x32xbf16, #tpu.memory_space<vmem>>, vector<12x32xbf16>
    %cst_21 = arith.constant dense<0.000000e+00> : vector<8x32xf32>
    %21 = tpu.matmul %19, %20, %cst_21 {dimension_numbers = #tpu.dot_dimension_numbers<[1], [0], [0], [1], [0, 0, 1, 1], [], []>} : vector<8x12xbf16>, vector<12x32xbf16>, vector<8x32xf32> -> vector<8x32xf32>
    %cst_22 = arith.constant dense<0.000000e+00> : vector<8xf32>
    %22 = vector.multi_reduction <add>, %21, %cst_22 [1] : vector<8x32xf32> to vector<8xf32>
    %23 = vector.shape_cast %22 : vector<8xf32> to vector<8x1xf32>
    %cst_23 = arith.constant 3.200000e+01 : f32
    %24 = vector.broadcast %cst_23 : f32 to vector<8x1xf32>
    %25 = arith.divf %23, %24 : vector<8x1xf32>
    %26 = arith.mulf %21, %21 : vector<8x32xf32>
    %cst_24 = arith.constant dense<0.000000e+00> : vector<8xf32>
    %27 = vector.multi_reduction <add>, %26, %cst_24 [1] : vector<8x32xf32> to vector<8xf32>
    %28 = vector.shape_cast %27 : vector<8xf32> to vector<8x1xf32>
    %cst_25 = arith.constant 3.200000e+01 : f32
    %29 = vector.broadcast %cst_25 : f32 to vector<8x1xf32>
    %30 = arith.divf %28, %29 : vector<8x1xf32>
    %31 = arith.mulf %25, %25 : vector<8x1xf32>
    %32 = arith.subf %30, %31 : vector<8x1xf32>
    %cst_26 = arith.constant 9.99999974E-6 : f32
    %33 = vector.broadcast %cst_26 : f32 to vector<8x1xf32>
    %34 = arith.addf %32, %33 : vector<8x1xf32>
    %35 = math.rsqrt %34 : vector<8x1xf32>
    %c0_27 = arith.constant 0 : index
    %c0_28 = arith.constant 0 : index
    %36 = vector.load %arg3[%c0_27, %c0_28] : memref<8x2xf32, #tpu.memory_space<vmem>>, vector<8x1xf32>
    %37 = arith.mulf %36, %35 : vector<8x1xf32>
    %c0_29 = arith.constant 0 : index
    %c1_30 = arith.constant 1 : index
    %38 = vector.load %arg3[%c0_29, %c1_30] : memref<8x2xf32, #tpu.memory_space<vmem>>, vector<8x1xf32>
    %39 = arith.mulf %25, %37 : vector<8x1xf32>
    %40 = arith.subf %38, %39 : vector<8x1xf32>
    %41 = vector.broadcast %37 : vector<8x1xf32> to vector<8x32xf32>
    %42 = arith.mulf %21, %41 : vector<8x32xf32>
    %43 = vector.broadcast %40 : vector<8x1xf32> to vector<8x32xf32>
    %44 = arith.addf %42, %43 : vector<8x32xf32>
    %cst_31 = arith.constant 0.000000e+00 : f32
    %45 = vector.broadcast %cst_31 : f32 to vector<8x32xf32>
    %46 = arith.maximumf %44, %45 : vector<8x32xf32>
    %47 = arith.truncf %46 : vector<8x32xf32> to vector<8x32xbf16>
    %48 = vector.extract_strided_slice %47 {offsets = [0, 0], sizes = [8, 16], strides = [1, 1]} : vector<8x32xbf16> to vector<8x16xbf16>
    %c0_32 = arith.constant 0 : index
    %c1_33 = arith.constant 1 : index
    %49 = vector.load %arg8[%c0_32, %c1_33] : memref<16x18xbf16, #tpu.memory_space<vmem>>, vector<8x16xbf16>
    tpu.vector_store %arg8[%c0_32, %c1_33], %48 {strides = array<i32>} : memref<16x18xbf16, #tpu.memory_space<vmem>>, vector<8x16xbf16>,
    %50 = vector.extract_strided_slice %47 {offsets = [0, 16], sizes = [8, 16], strides = [1, 1]} : vector<8x32xbf16> to vector<8x16xbf16>
    %c8_34 = arith.constant 8 : index
    %c1_35 = arith.constant 1 : index
    %51 = vector.load %arg8[%c8_34, %c1_35] : memref<16x18xbf16, #tpu.memory_space<vmem>>, vector<8x16xbf16>
    tpu.vector_store %arg8[%c8_34, %c1_35], %50 {strides = array<i32>} : memref<16x18xbf16, #tpu.memory_space<vmem>>, vector<8x16xbf16>,
    %cst_36 = arith.constant 0.000000e+00 : bf16
    %52 = vector.broadcast %cst_36 : bf16 to vector<16x1xbf16>
    %c0_37 = arith.constant 0 : index
    %c0_38 = arith.constant 0 : index
    %53 = vector.load %arg8[%c0_37, %c0_38] : memref<16x18xbf16, #tpu.memory_space<vmem>>, vector<16x1xbf16>
    tpu.vector_store %arg8[%c0_37, %c0_38], %52 {strides = array<i32>} : memref<16x18xbf16, #tpu.memory_space<vmem>>, vector<16x1xbf16>,
    %cst_39 = arith.constant 0.000000e+00 : bf16
    %54 = vector.broadcast %cst_39 : bf16 to vector<16x1xbf16>
    %c0_40 = arith.constant 0 : index
    %c17_41 = arith.constant 17 : index
    %55 = vector.load %arg8[%c0_40, %c17_41] : memref<16x18xbf16, #tpu.memory_space<vmem>>, vector<16x1xbf16>
    tpu.vector_store %arg8[%c0_40, %c17_41], %54 {strides = array<i32>} : memref<16x18xbf16, #tpu.memory_space<vmem>>, vector<16x1xbf16>,
    %c0_42 = arith.constant 0 : index
    %c0_43 = arith.constant 0 : index
    %56 = vector.load %arg8[%c0_42, %c0_43] : memref<16x18xbf16, #tpu.memory_space<vmem>>, vector<16x18xbf16>
    %c0_44 = arith.constant 0 : index
    %c0_45 = arith.constant 0 : index
    %57 = vector.load %arg6[%c0_44, %c0_45] : memref<18x18xbf16, #tpu.memory_space<vmem>>, vector<18x18xbf16>
    %cst_46 = arith.constant dense<0.000000e+00> : vector<16x18xf32>
    %58 = tpu.matmul %56, %57, %cst_46 {dimension_numbers = #tpu.dot_dimension_numbers<[1], [0], [0], [1], [0, 0, 1, 1], [], []>} : vector<16x18xbf16>, vector<18x18xbf16>, vector<16x18xf32> -> vector<16x18xf32>
    %59 = arith.truncf %58 : vector<16x18xf32> to vector<16x18xbf16>
    %60 = vector.extract_strided_slice %59 {offsets = [0, 0], sizes = [8, 8], strides = [1, 1]} : vector<16x18xbf16> to vector<8x8xbf16>
    %c0_47 = arith.constant 0 : index
    %c0_48 = arith.constant 0 : index
    %61 = vector.load %arg9[%c0_47, %c0_48] : memref<24x32xbf16, #tpu.memory_space<vmem>>, vector<8x8xbf16>
    tpu.vector_store %arg9[%c0_47, %c0_48], %60 {strides = array<i32>} : memref<24x32xbf16, #tpu.memory_space<vmem>>, vector<8x8xbf16>,
    %62 = vector.extract_strided_slice %59 {offsets = [0, 9], sizes = [8, 8], strides = [1, 1]} : vector<16x18xbf16> to vector<8x8xbf16>
    %c8_49 = arith.constant 8 : index
    %c0_50 = arith.constant 0 : index
    %63 = vector.load %arg9[%c8_49, %c0_50] : memref<24x32xbf16, #tpu.memory_space<vmem>>, vector<8x8xbf16>
    tpu.vector_store %arg9[%c8_49, %c0_50], %62 {strides = array<i32>} : memref<24x32xbf16, #tpu.memory_space<vmem>>, vector<8x8xbf16>,
    %64 = vector.extract_strided_slice %59 {offsets = [0, 1], sizes = [8, 8], strides = [1, 1]} : vector<16x18xbf16> to vector<8x8xbf16>
    %c16_51 = arith.constant 16 : index
    %c0_52 = arith.constant 0 : index
    %65 = vector.load %arg9[%c16_51, %c0_52] : memref<24x32xbf16, #tpu.memory_space<vmem>>, vector<8x8xbf16>
    tpu.vector_store %arg9[%c16_51, %c0_52], %64 {strides = array<i32>} : memref<24x32xbf16, #tpu.memory_space<vmem>>, vector<8x8xbf16>,
    %66 = vector.extract_strided_slice %59 {offsets = [8, 0], sizes = [8, 8], strides = [1, 1]} : vector<16x18xbf16> to vector<8x8xbf16>
    %c0_53 = arith.constant 0 : index
    %c8_54 = arith.constant 8 : index
    %67 = vector.load %arg9[%c0_53, %c8_54] : memref<24x32xbf16, #tpu.memory_space<vmem>>, vector<8x8xbf16>
    tpu.vector_store %arg9[%c0_53, %c8_54], %66 {strides = array<i32>} : memref<24x32xbf16, #tpu.memory_space<vmem>>, vector<8x8xbf16>,
    %68 = vector.extract_strided_slice %59 {offsets = [8, 9], sizes = [8, 8], strides = [1, 1]} : vector<16x18xbf16> to vector<8x8xbf16>
    %c8_55 = arith.constant 8 : index
    %c8_56 = arith.constant 8 : index
    %69 = vector.load %arg9[%c8_55, %c8_56] : memref<24x32xbf16, #tpu.memory_space<vmem>>, vector<8x8xbf16>
    tpu.vector_store %arg9[%c8_55, %c8_56], %68 {strides = array<i32>} : memref<24x32xbf16, #tpu.memory_space<vmem>>, vector<8x8xbf16>,
    %70 = vector.extract_strided_slice %59 {offsets = [8, 1], sizes = [8, 8], strides = [1, 1]} : vector<16x18xbf16> to vector<8x8xbf16>
    %c16_57 = arith.constant 16 : index
    %c8_58 = arith.constant 8 : index
    %71 = vector.load %arg9[%c16_57, %c8_58] : memref<24x32xbf16, #tpu.memory_space<vmem>>, vector<8x8xbf16>
    tpu.vector_store %arg9[%c16_57, %c8_58], %70 {strides = array<i32>} : memref<24x32xbf16, #tpu.memory_space<vmem>>, vector<8x8xbf16>,
    %c0_59 = arith.constant 0 : index
    %c0_60 = arith.constant 0 : index
    %72 = vector.load %arg4[%c0_59, %c0_60] : memref<16x24xbf16, #tpu.memory_space<vmem>>, vector<16x24xbf16>
    %c0_61 = arith.constant 0 : index
    %c0_62 = arith.constant 0 : index
    %73 = vector.load %arg9[%c0_61, %c0_62] : memref<24x32xbf16, #tpu.memory_space<vmem>>, vector<24x16xbf16>
    %cst_63 = arith.constant dense<0.000000e+00> : vector<16x16xf32>
    %74 = tpu.matmul %72, %73, %cst_63 {dimension_numbers = #tpu.dot_dimension_numbers<[1], [0], [0], [1], [0, 0, 1, 1], [], []>} : vector<16x24xbf16>, vector<24x16xbf16>, vector<16x16xf32> -> vector<16x16xf32>
    %cst_64 = arith.constant dense<0.000000e+00> : vector<16xf32>
    %75 = vector.multi_reduction <add>, %74, %cst_64 [1] : vector<16x16xf32> to vector<16xf32>
    %76 = vector.shape_cast %75 : vector<16xf32> to vector<16x1xf32>
    %cst_65 = arith.constant 1.600000e+01 : f32
    %77 = vector.broadcast %cst_65 : f32 to vector<16x1xf32>
    %78 = arith.divf %76, %77 : vector<16x1xf32>
    %79 = arith.mulf %74, %74 : vector<16x16xf32>
    %cst_66 = arith.constant dense<0.000000e+00> : vector<16xf32>
    %80 = vector.multi_reduction <add>, %79, %cst_66 [1] : vector<16x16xf32> to vector<16xf32>
    %81 = vector.shape_cast %80 : vector<16xf32> to vector<16x1xf32>
    %cst_67 = arith.constant 1.600000e+01 : f32
    %82 = vector.broadcast %cst_67 : f32 to vector<16x1xf32>
    %83 = arith.divf %81, %82 : vector<16x1xf32>
    %84 = arith.mulf %78, %78 : vector<16x1xf32>
    %85 = arith.subf %83, %84 : vector<16x1xf32>
    %cst_68 = arith.constant 9.99999974E-6 : f32
    %86 = vector.broadcast %cst_68 : f32 to vector<16x1xf32>
    %87 = arith.addf %85, %86 : vector<16x1xf32>
    %88 = math.rsqrt %87 : vector<16x1xf32>
    %c0_69 = arith.constant 0 : index
    %c0_70 = arith.constant 0 : index
    %89 = vector.load %arg5[%c0_69, %c0_70] : memref<16x2xf32, #tpu.memory_space<vmem>>, vector<16x1xf32>
    %90 = arith.mulf %89, %88 : vector<16x1xf32>
    %c0_71 = arith.constant 0 : index
    %c1_72 = arith.constant 1 : index
    %91 = vector.load %arg5[%c0_71, %c1_72] : memref<16x2xf32, #tpu.memory_space<vmem>>, vector<16x1xf32>
    %92 = arith.mulf %78, %90 : vector<16x1xf32>
    %93 = arith.subf %91, %92 : vector<16x1xf32>
    %94 = vector.broadcast %90 : vector<16x1xf32> to vector<16x16xf32>
    %95 = arith.mulf %74, %94 : vector<16x16xf32>
    %96 = vector.broadcast %93 : vector<16x1xf32> to vector<16x16xf32>
    %97 = arith.addf %95, %96 : vector<16x16xf32>
    %cst_73 = arith.constant 0.000000e+00 : f32
    %98 = vector.broadcast %cst_73 : f32 to vector<16x16xf32>
    %99 = arith.maximumf %97, %98 : vector<16x16xf32>
    %100 = vector.extract_strided_slice %99 {offsets = [0, 0], sizes = [16, 8], strides = [1, 1]} : vector<16x16xf32> to vector<16x8xf32>
    %c0_74 = arith.constant 0 : index
    %c0_75 = arith.constant 0 : index
    %101 = vector.load %arg7[%c0_74, %c0_75] : memref<32x8xf32, #tpu.memory_space<vmem>>, vector<16x8xf32>
    tpu.vector_store %arg7[%c0_74, %c0_75], %100 {strides = array<i32>} : memref<32x8xf32, #tpu.memory_space<vmem>>, vector<16x8xf32>,
    %102 = vector.extract_strided_slice %99 {offsets = [0, 8], sizes = [16, 8], strides = [1, 1]} : vector<16x16xf32> to vector<16x8xf32>
    %c16_76 = arith.constant 16 : index
    %c0_77 = arith.constant 0 : index
    %103 = vector.load %arg7[%c16_76, %c0_77] : memref<32x8xf32, #tpu.memory_space<vmem>>, vector<16x8xf32>
    tpu.vector_store %arg7[%c16_76, %c0_77], %102 {strides = array<i32>} : memref<32x8xf32, #tpu.memory_space<vmem>>, vector<16x8xf32>,
    return
  }
  func.func @transform_0(%arg0: i32) -> (i32, i32) {
    %c0_i32 = arith.constant 0 : i32
    %c0_i32_0 = arith.constant 0 : i32
    %c0_i32_1 = arith.constant 0 : i32
    return %c0_i32, %c0_i32_0 : i32, i32
  }
  func.func @transform_1(%arg0: i32) -> (i32, i32) {
    %c0_i32 = arith.constant 0 : i32
    %c0_i32_0 = arith.constant 0 : i32
    %c0_i32_1 = arith.constant 0 : i32
    return %c0_i32, %c0_i32_0 : i32, i32
  }
  func.func @transform_2(%arg0: i32) -> (i32, i32) {
    %c0_i32 = arith.constant 0 : i32
    %c0_i32_0 = arith.constant 0 : i32
    %c0_i32_1 = arith.constant 0 : i32
    return %c0_i32, %c0_i32_0 : i32, i32
  }
  func.func @transform_3(%arg0: i32) -> (i32, i32) {
    %c0_i32 = arith.constant 0 : i32
    %c0_i32_0 = arith.constant 0 : i32
    %c0_i32_1 = arith.constant 0 : i32
    return %c0_i32, %c0_i32_0 : i32, i32
  }
  func.func @transform_4(%arg0: i32) -> (i32, i32) {
    %c0_i32 = arith.constant 0 : i32
    %c0_i32_0 = arith.constant 0 : i32
    %c0_i32_1 = arith.constant 0 : i32
    return %c0_i32, %c0_i32_0 : i32, i32
  }
  func.func @transform_5(%arg0: i32) -> (i32, i32) {
    %c0_i32 = arith.constant 0 : i32
    %c0_i32_0 = arith.constant 0 : i32
    %c0_i32_1 = arith.constant 0 : i32
    return %c0_i32, %c0_i32_0 : i32, i32
  }
  func.func @transform_6(%arg0: i32) -> (i32, i32) {
    %c0_i32 = arith.constant 0 : i32
    %c0_i32_0 = arith.constant 0 : i32
    %c0_i32_1 = arith.constant 0 : i32
    return %c0_i32, %c0_i32_0 : i32, i32
  }
}

</mosaic_0001>

<llo_original>
// kernel: tpu_custom_call.1
$region0: #{tpu_custom_call.1}
  #allocation0 [shape = 'u32[]', space=smem, size = 0x4, offset = 0x4, fixed_abs, tag = 'smem constant byte address 0x4 - core index']
  #allocation1 [shape = 'u32[144,128]{1,0:T(1,128)}', space=vmem, size = 0x12000, scoped, tag = 'internal scratch']
  #allocation2 [shape = 'bf16[16,18]{1,0:T(8,128)(2,1)}', space=vmem, size = 0x1000, scoped, tag = 'scratch operand']
  #allocation3 [shape = 'bf16[24,32]{1,0:T(8,128)(2,1)}', space=vmem, size = 0x1800, scoped, tag = 'scratch operand']
  %s0 = inlined_call_operand.vmem [shape: bf16[8,16], index: 0, kind: input, shape index: {}]
  %s1 = inlined_call_operand.vmem [shape: bf16[8,12], index: 1, kind: input, shape index: {}]
  %s2 = inlined_call_operand.vmem [shape: f32[8,2], index: 2, kind: input, shape index: {}]
  %s3 = inlined_call_operand.vmem [shape: bf16[16,24], index: 3, kind: input, shape index: {}]
  %s4 = inlined_call_operand.vmem [shape: f32[16,2], index: 4, kind: input, shape index: {}]
  %s5 = inlined_call_operand.vmem [shape: bf16[18,18], index: 5, kind: input, shape index: {}]
  %s6 = inlined_call_operand.vmem [shape: f32[32,8], index: 6, kind: output, shape index: {}]
  %s7 = sld [smem:[#allocation0]]
  $region34: #{tpu_custom_call.1} parent=0
    _
  %s9 = ssub.s32 1, %s7
  %s10 = scalar_select 0, %s9, %s7
  // Predicated region
  $region2: #{tpu_custom_call.1} parent=0 // pred_check
    _
  $region3: #{tpu_custom_call.1} parent=0 // pred_check_branch
    %12 = sbr.rel (0) target = $region5
  $region4: #{tpu_custom_call.1} parent=0 // pred_region
    _
  $region5: #{tpu_custom_call.1} parent=0 // pred_fallthru
    _
  // Predicated region
  $region6: #{tpu_custom_call.1} parent=0 // pred_check
    _
  $region7: #{tpu_custom_call.1} parent=0 // pred_check_branch
    %14 = sbr.rel (0) target = $region9
  $region8: #{tpu_custom_call.1} parent=0 // pred_region
    _
  $region9: #{tpu_custom_call.1} parent=0 // pred_fallthru
    _
  // Predicated region
  $region10: #{tpu_custom_call.1} parent=0 // pred_check
    _
  $region11: #{tpu_custom_call.1} parent=0 // pred_check_branch
    %16 = sbr.rel (0) target = $region13
  $region12: #{tpu_custom_call.1} parent=0 // pred_region
    _
  $region13: #{tpu_custom_call.1} parent=0 // pred_fallthru
    _
  // Predicated region
  $region14: #{tpu_custom_call.1} parent=0 // pred_check
    _
  $region15: #{tpu_custom_call.1} parent=0 // pred_check_branch
    %18 = sbr.rel (0) target = $region17
  $region16: #{tpu_custom_call.1} parent=0 // pred_region
    _
  $region17: #{tpu_custom_call.1} parent=0 // pred_fallthru
    _
  // Predicated region
  $region18: #{tpu_custom_call.1} parent=0 // pred_check
    _
  $region19: #{tpu_custom_call.1} parent=0 // pred_check_branch
    %20 = sbr.rel (0) target = $region21
  $region20: #{tpu_custom_call.1} parent=0 // pred_region
    _
  $region21: #{tpu_custom_call.1} parent=0 // pred_fallthru
    _
  // Predicated region
  $region22: #{tpu_custom_call.1} parent=0 // pred_check
    _
  $region23: #{tpu_custom_call.1} parent=0 // pred_check_branch
    %22 = sbr.rel (0) target = $region25
  $region24: #{tpu_custom_call.1} parent=0 // pred_region
    _
  $region25: #{tpu_custom_call.1} parent=0 // pred_fallthru
    _
  %v24 = vld [vmem:[%s0] sm:$0xf]
  %26 = vrot.lane.b32.xlu0 %v24, 1
  %v27 = vpop.permute.xlu0 %26
  %vm29 = vcmask 134152
  %30 = vst.msk [vmem:[#allocation2] sm:$0xf] %vm29, %v27
  %vm31 = vcmask 3072
  %32 = vst.msk [vmem:[#allocation2] sm:$0xf] %vm31, 0
  %vm33 = vcmask 142472
  %34 = vst.msk [vmem:[#allocation2] sm:$0xf] %vm33, 0
  %v35 = vld [vmem:[#allocation2] sm:$0xf]
  %vm36 = vcmask 123904
  %37 = vst.msk [vmem:[#allocation3] sm:$0x3] %vm36, %v35
  %v39 = vrot.slane %v35, 6
  %40 = vrot.lane.b32.xlu0 %v39, 127
  %v41 = vpop.permute.xlu0 %40
  %vm43 = vcmask 125954
  %44 = vst.msk [vmem:[#allocation3] sm:$0xc] %vm43, %v41
  %45 = vrot.lane.b32.xlu0 %v35, 126
  %v46 = vpop.permute.xlu0 %45
  %48 = vst.msk [vmem:[#allocation3 + $0x4] sm:$0x3] %vm36, %v46
  %v49 = vrot.slane %v39, 4
  %50 = vrot.lane.b32.xlu0 %v49, 16
  %v51 = vpop.permute.xlu0 %50
  %vm53 = vcmask 255104
  %54 = vst.msk [vmem:[#allocation3] sm:$0x3] %vm53, %v51
  %55 = vrot.lane.b32.xlu0 %v35, 15
  %v56 = vpop.permute.xlu0 %55
  %vm58 = vcmask 257154
  %59 = vst.msk [vmem:[#allocation3] sm:$0xc] %vm58, %v56
  %60 = vrot.lane.b32.xlu0 %v49, 14
  %v61 = vpop.permute.xlu0 %60
  %63 = vst.msk [vmem:[#allocation3 + $0x4] sm:$0x3] %vm53, %v61
  %v64 = vld [vmem:[%s1] sm:$0xf]
  %v65 = vld [vmem:[#allocation3] sm:$0xf]
  %v66 = vld [vmem:[#allocation3 + $0x4] sm:$0x3]
  %v69 = vunpack.c.l.b16 %v65
  %v70 = vunpack.c.l.b16 %v66
  %v71 = vpack.c.b16 %v70, %v69
  %vm72 = vcmask 97280
  %v74 = vsel %vm72, %v64, 0
  %vm76 = vcmask 1045504
  %v78 = vsel %vm76, %v71, 0
  %80 = vmatprep.subr.bf16.mxu0 0
  %81 = vmatpush1.bf16.msra.mxu0 0
  %82 = vmatprep.subr.bf16.mxu0 0
  %83 = vmatpush1.bf16.msra.mxu0 0
  %84 = vmatprep.subr.bf16.mxu0 0
  %85 = vmatpush1.bf16.msra.mxu0 0
  %86 = vmatprep.subr.bf16.mxu0 0
  %87 = vmatpush1.bf16.msra.mxu0 0
  %88 = vmatprep.subr.bf16.mxu0 0
  %89 = vmatpush1.bf16.msra.mxu0 0
  %90 = vmatprep.subr.bf16.mxu0 0
  %91 = vmatpush1.bf16.msra.mxu0 0
  %92 = vmatprep.subr.bf16.mxu0 0
  %93 = vmatpush1.bf16.msra.mxu0 0
  %94 = vmatprep.subr.bf16.mxu0 0
  %95 = vmatpush1.bf16.msra.mxu0 %v78
  %96 = vmatprep.subr.bf16.mxu0 0
  %97 = vmatpush2.bf16.msra.mxu0 0
  %98 = vmatprep.subr.bf16.mxu0 0
  %99 = vmatpush2.bf16.msra.mxu0 0
  %100 = vmatprep.subr.bf16.mxu0 0
  %101 = vmatpush2.bf16.msra.mxu0 0
  %102 = vmatprep.subr.bf16.mxu0 0
  %103 = vmatpush2.bf16.msra.mxu0 0
  %104 = vmatprep.subr.bf16.mxu0 0
  %105 = vmatpush2.bf16.msra.mxu0 0
  %106 = vmatprep.subr.bf16.mxu0 0
  %107 = vmatpush2.bf16.msra.mxu0 0
  %108 = vmatprep.subr.bf16.mxu0 0
  %109 = vmatpush2.bf16.msra.mxu0 0
  %110 = vmatprep.subr.bf16.mxu0 0
  %111 = vmatpush2.bf16.msra.mxu0 0
  %112 = vmatprep.mubr.bf16.mxu0 0
  %113 = vmatmul.mubr.bf16.gmra.mxu0 %v74
  %v114 = vpop.f32.mrf.mxu0
  %v115 = vadd.f32 0.0, %v114
  %v116 = vpop.f32.mrf.mxu0
  %v117 = vpop.f32.mrf.mxu0
  %v118 = vpop.f32.mrf.mxu0
  %119 = vdwg.mxu0
  %vm120 = vcmask 261120
  %v121 = vsel %vm120, %v115, 0.0
  %122 = vadd.xlane.f32.xlu0 %v121
  %v123 = vpop.xlane.xlu0 %122
  %v124 = vrcp.pop 32.0
  %v125 = vmul.f32 %v123, %v124
  %v126 = vmul.f32 %v115, %v115
  %v127 = vsel %vm120, %v126, 0.0
  %128 = vadd.xlane.f32.xlu0 %v127
  %v129 = vpop.xlane.xlu0 %128
  %v130 = vmul.f32 %v129, %v124
  %v131 = vmul.f32 %v125, %v125
  %v132 = vsub.f32 %v130, %v131
  %v133 = vadd.f32 %v132, 1e-05
  %v134 = vrsqrt.pop %v133
  %v135 = vld [vmem:[%s2] sm:$0xff]
  %v136 = vmul.f32 %v135, %v134
  %v137 = vmul.f32 %v125, %v136
  %139 = vrot.lane.b32.xlu0 %v137, 1
  %v140 = vpop.permute.xlu0 %139
  %v142 = vsub.f32 %v135, %v140
  %144 = vset.pattern.permute.xlu0 0
  %145 = vperm.xlu0 %144, %v136
  %v146 = vpop.permute.xlu0 %145
  %v148 = vmul.f32 %v115, %v146
  %150 = vset.pattern.permute.xlu0 1
  %151 = vperm.xlu0 %150, %v142
  %v152 = vpop.permute.xlu0 %151
  %v154 = vadd.f32 %v148, %v152
  %v155 = vmax.f32 %v154, 0.0
  %v156 = vpack.c.bf16 %v155, %v155
  %v158 = vunpack.c.l.b16 %v156
  %v159 = vpack.c.b16 %v158, %v158
  %160 = vrot.lane.b32.xlu0 %v159, 1
  %v161 = vpop.permute.xlu0 %160
  %163 = vst.msk [vmem:[#allocation2] sm:$0xf] %vm29, %v161
  %164 = vrot.lane.b32.xlu0 %v159, 113
  %v165 = vpop.permute.xlu0 %164
  %167 = vst.msk [vmem:[#allocation2 + $0x4] sm:$0xf] %vm29, %v165
  %168 = vst.msk [vmem:[#allocation2] sm:$0xf] %vm31, 0
  %169 = vst.msk [vmem:[#allocation2 + $0x4] sm:$0xf] %vm31, 0
  %170 = vst.msk [vmem:[#allocation2] sm:$0xf] %vm33, 0
  %171 = vst.msk [vmem:[#allocation2 + $0x4] sm:$0xf] %vm33, 0
  %v172 = vld [vmem:[#allocation2] sm:$0xf]
  %v173 = vld [vmem:[#allocation2 + $0x4] sm:$0xf]
  %v174 = vld [vmem:[%s5] sm:$0xf]
  %v175 = vld [vmem:[%s5 + $0x4] sm:$0xf]
  %v176 = vld [vmem:[%s5 + $0x8] sm:$0x1]
  %v179 = vunpack.c.l.b16 %v172
  %v180 = vunpack.c.l.b16 %v173
  %v181 = vpack.c.b16 %v180, %v179
  %v185 = vunpack.c.l.b16 %v174
  %v186 = vunpack.c.l.b16 %v175
  %v187 = vunpack.c.l.b16 %v176
  %v188 = vpack.c.b16 %v186, %v185
  %v189 = vpack.c.b16 %v187, %v187
  %vm191 = vcmask 146432
  %v193 = vsel %vm191, %v181, 0
  %vm195 = vcmask 1040384
  %v197 = vsel %vm195, %v189, 0
  %199 = vmatprep.subr.bf16.mxu0 0
  %200 = vmatpush1.bf16.msra.mxu0 0
  %201 = vmatprep.subr.bf16.mxu0 0
  %202 = vmatpush1.bf16.msra.mxu0 0
  %203 = vmatprep.subr.bf16.mxu0 0
  %204 = vmatpush1.bf16.msra.mxu0 0
  %205 = vmatprep.subr.bf16.mxu0 0
  %206 = vmatpush1.bf16.msra.mxu0 0
  %207 = vmatprep.subr.bf16.mxu0 0
  %208 = vmatpush1.bf16.msra.mxu0 0
  %209 = vmatprep.subr.bf16.mxu0 0
  %210 = vmatpush1.bf16.msra.mxu0 0
  %211 = vmatprep.subr.bf16.mxu0 0
  %212 = vmatpush1.bf16.msra.mxu0 %v197
  %213 = vmatprep.subr.bf16.mxu0 0
  %214 = vmatpush1.bf16.msra.mxu0 %v188
  %215 = vmatprep.subr.bf16.mxu0 0
  %216 = vmatpush2.bf16.msra.mxu0 0
  %217 = vmatprep.subr.bf16.mxu0 0
  %218 = vmatpush2.bf16.msra.mxu0 0
  %219 = vmatprep.subr.bf16.mxu0 0
  %220 = vmatpush2.bf16.msra.mxu0 0
  %221 = vmatprep.subr.bf16.mxu0 0
  %222 = vmatpush2.bf16.msra.mxu0 0
  %223 = vmatprep.subr.bf16.mxu0 0
  %224 = vmatpush2.bf16.msra.mxu0 0
  %225 = vmatprep.subr.bf16.mxu0 0
  %226 = vmatpush2.bf16.msra.mxu0 0
  %227 = vmatprep.subr.bf16.mxu0 0
  %228 = vmatpush2.bf16.msra.mxu0 0
  %229 = vmatprep.subr.bf16.mxu0 0
  %230 = vmatpush2.bf16.msra.mxu0 0
  %231 = vmatprep.mubr.bf16.mxu0 0
  %232 = vmatmul.mubr.bf16.gmra.mxu0 %v193
  %v233 = vpop.f32.mrf.mxu0
  %v234 = vadd.f32 0.0, %v233
  %v235 = vpop.f32.mrf.mxu0
  %v236 = vpop.f32.mrf.mxu0
  %v237 = vadd.f32 0.0, %v236
  %v238 = vpop.f32.mrf.mxu0
  %239 = vdwg.mxu0
  %v240 = vpack.c.bf16 %v237, %v234
  %vm241 = vcmask 60416
  %242 = vst.msk [vmem:[#allocation3] sm:$0xf] %vm241, %v240
  %v244 = vunpack.c.l.b16 %v240
  %v245 = vpack.c.b16 %v244, %v244
  %246 = vrot.lane.b32.xlu0 %v245, 119
  %v247 = vpop.permute.xlu0 %246
  %249 = vst.msk [vmem:[#allocation3 + $0x4] sm:$0xf] %vm241, %v247
  %250 = vrot.lane.b32.xlu0 %v245, 127
  %v251 = vpop.permute.xlu0 %250
  %253 = vst.msk [vmem:[#allocation3 + $0x8] sm:$0xf] %vm241, %v251
  %v254 = vunpack.c.h.b16 %v240
  %v255 = vpack.c.b16 %v254, %v254
  %256 = vrot.lane.b32.xlu0 %v255, 8
  %v257 = vpop.permute.xlu0 %256
  %vm259 = vcmask 126016
  %260 = vst.msk [vmem:[#allocation3] sm:$0xf] %vm259, %v257
  %261 = vrot.lane.b32.xlu0 %v255, 127
  %v262 = vpop.permute.xlu0 %261
  %264 = vst.msk [vmem:[#allocation3 + $0x4] sm:$0xf] %vm259, %v262
  %265 = vrot.lane.b32.xlu0 %v255, 7
  %v266 = vpop.permute.xlu0 %265
  %268 = vst.msk [vmem:[#allocation3 + $0x8] sm:$0xf] %vm259, %v266
  %v269 = vld [vmem:[%s3] sm:$0xf]
  %v270 = vld [vmem:[%s3 + $0x4] sm:$0xf]
  %v271 = vld [vmem:[#allocation3] sm:$0xf]
  %v272 = vld [vmem:[#allocation3 + $0x4] sm:$0xf]
  %v273 = vld [vmem:[#allocation3 + $0x8] sm:$0xf]
  %v276 = vunpack.c.l.b16 %v269
  %v277 = vunpack.c.l.b16 %v270
  %v278 = vpack.c.b16 %v277, %v276
  %v282 = vunpack.c.l.b16 %v271
  %v283 = vunpack.c.l.b16 %v272
  %v284 = vunpack.c.l.b16 %v273
  %v285 = vpack.c.b16 %v283, %v282
  %v286 = vpack.c.b16 %v284, %v284
  %vm288 = vcmask 195584
  %v290 = vsel %vm288, %v278, 0
  %vm292 = vcmask 1043456
  %v294 = vsel %vm292, %v286, 0
  %296 = vmatprep.subr.bf16.mxu0 0
  %297 = vmatpush1.bf16.msra.mxu0 0
  %298 = vmatprep.subr.bf16.mxu0 0
  %299 = vmatpush1.bf16.msra.mxu0 0
  %300 = vmatprep.subr.bf16.mxu0 0
  %301 = vmatpush1.bf16.msra.mxu0 0
  %302 = vmatprep.subr.bf16.mxu0 0
  %303 = vmatpush1.bf16.msra.mxu0 0
  %304 = vmatprep.subr.bf16.mxu0 0
  %305 = vmatpush1.bf16.msra.mxu0 0
  %306 = vmatprep.subr.bf16.mxu0 0
  %307 = vmatpush1.bf16.msra.mxu0 0
  %308 = vmatprep.subr.bf16.mxu0 0
  %309 = vmatpush1.bf16.msra.mxu0 %v294
  %310 = vmatprep.subr.bf16.mxu0 0
  %311 = vmatpush1.bf16.msra.mxu0 %v285
  %312 = vmatprep.subr.bf16.mxu0 0
  %313 = vmatpush2.bf16.msra.mxu0 0
  %314 = vmatprep.subr.bf16.mxu0 0
  %315 = vmatpush2.bf16.msra.mxu0 0
  %316 = vmatprep.subr.bf16.mxu0 0
  %317 = vmatpush2.bf16.msra.mxu0 0
  %318 = vmatprep.subr.bf16.mxu0 0
  %319 = vmatpush2.bf16.msra.mxu0 0
  %320 = vmatprep.subr.bf16.mxu0 0
  %321 = vmatpush2.bf16.msra.mxu0 0
  %322 = vmatprep.subr.bf16.mxu0 0
  %323 = vmatpush2.bf16.msra.mxu0 0
  %324 = vmatprep.subr.bf16.mxu0 0
  %325 = vmatpush2.bf16.msra.mxu0 0
  %326 = vmatprep.subr.bf16.mxu0 0
  %327 = vmatpush2.bf16.msra.mxu0 0
  %328 = vmatprep.mubr.bf16.mxu0 0
  %329 = vmatmul.mubr.bf16.gmra.mxu0 %v290
  %v330 = vpop.f32.mrf.mxu0
  %v331 = vadd.f32 0.0, %v330
  %v332 = vpop.f32.mrf.mxu0
  %v333 = vpop.f32.mrf.mxu0
  %v334 = vadd.f32 0.0, %v333
  %v335 = vpop.f32.mrf.mxu0
  %336 = vdwg.mxu0
  %vm337 = vcmask 130048
  %v338 = vsel %vm337, %v331, 0.0
  %339 = vadd.xlane.f32.xlu0 %v338
  %v340 = vpop.xlane.xlu0 %339
  %v341 = vsel %vm337, %v334, 0.0
  %342 = vadd.xlane.f32.xlu0 %v341
  %v343 = vpop.xlane.xlu0 %342
  %v344 = vrcp.pop 16.0
  %v345 = vmul.f32 %v340, %v344
  %v346 = vmul.f32 %v343, %v344
  %v347 = vmul.f32 %v331, %v331
  %v348 = vmul.f32 %v334, %v334
  %v349 = vsel %vm337, %v347, 0.0
  %350 = vadd.xlane.f32.xlu0 %v349
  %v351 = vpop.xlane.xlu0 %350
  %v352 = vsel %vm337, %v348, 0.0
  %353 = vadd.xlane.f32.xlu0 %v352
  %v354 = vpop.xlane.xlu0 %353
  %v355 = vmul.f32 %v351, %v344
  %v356 = vmul.f32 %v354, %v344
  %v357 = vmul.f32 %v345, %v345
  %v358 = vmul.f32 %v346, %v346
  %v359 = vsub.f32 %v355, %v357
  %v360 = vsub.f32 %v356, %v358
  %v361 = vadd.f32 %v359, 1e-05
  %v362 = vadd.f32 %v360, 1e-05
  %v363 = vrsqrt.pop %v361
  %v364 = vrsqrt.pop %v362
  %v365 = vld [vmem:[%s4] sm:$0xff]
  %v366 = vld [vmem:[%s4 + $0x8] sm:$0xff]
  %v367 = vmul.f32 %v365, %v363
  %v368 = vmul.f32 %v366, %v364
  %v369 = vmul.f32 %v345, %v367
  %v370 = vmul.f32 %v346, %v368
  %373 = vrot.lane.b32.xlu0 %v369, 1
  %v374 = vpop.permute.xlu0 %373
  %375 = vrot.lane.b32.xlu0 %v370, 1
  %v376 = vpop.permute.xlu0 %375
  %v379 = vsub.f32 %v365, %v374
  %v380 = vsub.f32 %v366, %v376
  %382 = vset.pattern.permute.xlu0 0
  %383 = vperm.xlu0 %382, %v367
  %v384 = vpop.permute.xlu0 %383
  %387 = vset.pattern.permute.xlu0 0
  %388 = vperm.xlu0 %387, %v368
  %v389 = vpop.permute.xlu0 %388
  %v391 = vmul.f32 %v331, %v384
  %v392 = vmul.f32 %v334, %v389
  %394 = vset.pattern.permute.xlu0 1
  %395 = vperm.xlu0 %394, %v379
  %v396 = vpop.permute.xlu0 %395
  %399 = vset.pattern.permute.xlu0 1
  %400 = vperm.xlu0 %399, %v380
  %v401 = vpop.permute.xlu0 %400
  %v403 = vadd.f32 %v391, %v396
  %v404 = vadd.f32 %v392, %v401
  %v405 = vmax.f32 %v403, 0.0
  %v406 = vmax.f32 %v404, 0.0
  %vm407 = vcmask 64512
  %408 = vst.msk [vmem:[%s6] sm:$0xff] %vm407, %v405
  %409 = vst.msk [vmem:[%s6 + $0x8] sm:$0xff] %vm407, %v406
  %412 = vrot.lane.b32.xlu0 %v405, 120
  %v413 = vpop.permute.xlu0 %412
  %414 = vrot.lane.b32.xlu0 %v406, 120
  %v415 = vpop.permute.xlu0 %414
  %418 = vst.msk [vmem:[%s6 + $0x10] sm:$0xff] %vm407, %v413
  %419 = vst.msk [vmem:[%s6 + $0x18] sm:$0xff] %vm407, %v415
  // Predicated region
  $region26: #{tpu_custom_call.1} parent=0 // pred_check
    _
  $region27: #{tpu_custom_call.1} parent=0 // pred_check_branch
    %421 = sbr.rel (0) target = $region29
  $region28: #{tpu_custom_call.1} parent=0 // pred_region
    _
  $region29: #{tpu_custom_call.1} parent=0 // pred_fallthru
    _
  // Predicated region
  $region30: #{tpu_custom_call.1} parent=0 // pred_check
    _
  $region31: #{tpu_custom_call.1} parent=0 // pred_check_branch
    %423 = sbr.rel (0) target = $region33
  $region32: #{tpu_custom_call.1} parent=0 // pred_region
    _
  $region33: #{tpu_custom_call.1} parent=0 // pred_fallthru
    _

</llo_original>
